<compile_context>
chip_gen: v6e
topology: v6e:2x2x1
jax: 0.10.0
libtpu: 0.0.40
codegen_flags: <defaults>
</compile_context>

<pallas_src>
import jax
import jax.numpy as jnp
from jax import lax
from jax.experimental import pallas as pl
from jax.experimental.pallas import tpu as pltpu

FC1_PAD = 256  # lane-dense padding of the 200-wide fc1 output


# ----------------------------------------------------------------------------
# Kernel
# ----------------------------------------------------------------------------
def lstm_v2_kernel(
    xg_ref,      # (T, B, 4H) f32  pre-projected inputs: emb[token]@Wih^T + b   (gates i,f,o,g)
    whh_ref,     # (H, 4H)    f32  W_hh^T (gate order i,f,o,g)
    fc1w_ref,    # (H, 256)   f32  fc1.weight^T, zero-padded 200->256
    fc1b_ref,    # (1, 256)   f32  zero-padded
    drop_ref,    # (B, 256)   f32  dropout mask, already scaled by 1/(1-p)
    fc2w_ref,    # (256, O)   f32  fc2.weight^T, zero-padded rows 200->256
    fc2b_ref,    # (1, O)     f32
    out_ref,     # (B, O)     f32
):
    T = xg_ref.shape[0]
    B = xg_ref.shape[1]
    H = whh_ref.shape[0]

    whh = whh_ref[...]  # hoist weight load out of the recurrence

    def step(t, carry):
        h, c = carry
        # Only the hidden projection is on the serial path; the input
        # projection (+ both biases) was folded into xg in the wrapper.
        gates = xg_ref[t] + jnp.dot(h, whh, preferred_element_type=jnp.float32)  # (B, 4H)
        ifo = jax.nn.sigmoid(gates[:, : 3 * H])   # one full-width-ish sigmoid
        g_g = jnp.tanh(gates[:, 3 * H:])          # one tanh
        i_g = ifo[:, 0 * H:1 * H]
        f_g = ifo[:, 1 * H:2 * H]
        o_g = ifo[:, 2 * H:3 * H]
        c_new = f_g * c + i_g * g_g
        h_new = o_g * jnp.tanh(c_new)
        return (h_new, c_new)

    h0 = jnp.zeros((B, H), jnp.float32)  # matches init_hidden() zeros
    c0 = jnp.zeros((B, H), jnp.float32)
    h_last, _ = lax.fori_loop(0, T, step, (h0, c0), unroll=True)

    # fc1(x[-1]) + relu  (lane-dense 256-wide; padded lanes are exactly zero)
    z1 = jnp.dot(h_last, fc1w_ref[...], preferred_element_type=jnp.float32) + fc1b_ref[...]
    z1 = jnp.maximum(z1, 0.0)

    # F.dropout(p=0.5, training=True): pre-scaled keep-mask supplied by wrapper.
    z1 = z1 * drop_ref[...]

    # fc2 + sigmoid
    z2 = jnp.dot(z1, fc2w_ref[...], preferred_element_type=jnp.float32) + fc2b_ref[...]
    out_ref[...] = jax.nn.sigmoid(z2)


# ----------------------------------------------------------------------------
# One-time parameter preparation (transposes, gate reorder, fusion, padding)
# ----------------------------------------------------------------------------
def prepare_params(params):
    H = params["w_hh"].shape[1]
    O = params["fc2_w"].shape[0]

    def reorder_ifgo_to_ifog(w):
        # PyTorch LSTM gate order is (i, f, g, o) along the leading 4H axis.
        return jnp.concatenate(
            [w[0 * H:1 * H], w[1 * H:2 * H], w[3 * H:4 * H], w[2 * H:3 * H]], axis=0
        )

    w_ih_r = reorder_ifgo_to_ifog(params["w_ih"])            # (4H, E)
    w_hh_r = reorder_ifgo_to_ifog(params["w_hh"])            # (4H, H)
    b_r = reorder_ifgo_to_ifog(params["b_ih"] + params["b_hh"])  # (4H,)

    # Fuse embedding with the input projection + bias: (vocab, 4H)
    proj_table = params["embedding"] @ w_ih_r.T + b_r[None, :]

    fc1w_t = jnp.zeros((H, FC1_PAD), jnp.float32).at[:, :200].set(params["fc1_w"].T)
    fc1b = jnp.zeros((1, FC1_PAD), jnp.float32).at[:, :200].set(params["fc1_b"])
    fc2w_t = jnp.zeros((FC1_PAD, O), jnp.float32).at[:200, :].set(params["fc2_w"].T)
    fc2b = params["fc2_b"].reshape(1, O)

    return {
        "proj_table": proj_table,          # (vocab, 4H)
        "whh_t": w_hh_r.T,                 # (H, 4H)
        "fc1w_t": fc1w_t,                  # (H, 256)
        "fc1b": fc1b,                      # (1, 256)
        "fc2w_t": fc2w_t,                  # (256, O)
        "fc2b": fc2b,                      # (1, O)
    }


# ----------------------------------------------------------------------------
# Forward wrapper
# ----------------------------------------------------------------------------
@jax.jit
def lstm_v2_forward(tokens, prepped, drop_key):
    """tokens: (T, B) int32.  Returns (B, output_dim) float32."""
    T, B = tokens.shape
    O = prepped["fc2w_t"].shape[1]

    # Fused embedding + input-projection gather (XLA glue): (T, B, 4H)
    xg = jnp.take(prepped["proj_table"], tokens, axis=0)

    # Dropout keep-mask (p=0.5, training semantics as in the reference), scaled
    # by 1/(1-p).  Lane-dense (B, 256).
    # TODO(synk): PyTorch's per-call RNG stream is not reproducible here; mask
    # comes from jax.random instead.
    keep = jax.random.bernoulli(drop_key, 0.5, (B, FC1_PAD))
    drop_mask = keep.astype(jnp.float32) * 2.0

    vmem = pl.BlockSpec(memory_space=pltpu.MemorySpace.VMEM)

    out = pl.pallas_call(
        lstm_v2_kernel,
        out_shape=jax.ShapeDtypeStruct((B, O), jnp.float32),
        in_specs=[vmem] * 7,
        out_specs=vmem,
    )(
        xg,
        prepped["whh_t"],
        prepped["fc1w_t"],
        prepped["fc1b"],
        drop_mask,
        prepped["fc2w_t"],
        prepped["fc2b"],
    )
    return out


# ----------------------------------------------------------------------------
# Deterministic parameter init (shapes follow LSTMv2.__init__)
# ----------------------------------------------------------------------------
def init_params(key, vocab, emb_dim, hidden_dim, output_dim):
    ks = jax.random.split(key, 10)
    k = 1.0 / jnp.sqrt(hidden_dim)

    def unif(rng, shape, bound):
        return jax.random.uniform(rng, shape, jnp.float32, -bound, bound)

    return {
        # nn.Embedding: N(0, 1)
        "embedding": jax.random.normal(ks[0], (vocab, emb_dim), jnp.float32),
        # nn.LSTM layer 0 (unidirectional): U(-1/sqrt(H), 1/sqrt(H))
        "w_ih": unif(ks[1], (4 * hidden_dim, emb_dim), k),
        "w_hh": unif(ks[2], (4 * hidden_dim, hidden_dim), k),
        "b_ih": unif(ks[3], (4 * hidden_dim,), k),
        "b_hh": unif(ks[4], (4 * hidden_dim,), k),
        # fc1: Linear(hidden_dim, 200)
        "fc1_w": unif(ks[5], (200, hidden_dim), 1.0 / jnp.sqrt(hidden_dim)),
        "fc1_b": unif(ks[6], (200,), 1.0 / jnp.sqrt(hidden_dim)),
        # fc2: Linear(200, output_dim)
        "fc2_w": unif(ks[7], (output_dim, 200), 1.0 / jnp.sqrt(200.0)),
        "fc2_b": unif(ks[8], (output_dim,), 1.0 / jnp.sqrt(200.0)),
    }


if __name__ == "__main__":
    VOCAB = 50
    EMB = 32
    HID = 32
    OUT = 4
    SEQ = 8
    BATCH = 2

    key = jax.random.PRNGKey(0)
    pkey, tkey, dkey = jax.random.split(key, 3)

    params = init_params(pkey, VOCAB, EMB, HID, OUT)
    prepped = prepare_params(params)   # one-time weight prep (outside jit/fwd)

    tokens = jax.random.randint(tkey, (SEQ, BATCH), 0, VOCAB, dtype=jnp.int32)

    y = lstm_v2_forward(tokens, prepped, dkey)
    y = jax.block_until_ready(y)

    assert y.shape == (BATCH, OUT), y.shape
    assert bool(jnp.all(jnp.isfinite(y)))
    assert bool(jnp.all((y >= 0.0) & (y <= 1.0)))  # sigmoid output range
    print("KERNEL_OK")
</pallas_src>

<mosaic_0001>
module attributes {stable_mosaic.version = 11 : i64} {
  func.func @lstm_v2_kernel(%arg0: memref<8x2x128xf32, #tpu.memory_space<vmem>>, %arg1: memref<32x128xf32, #tpu.memory_space<vmem>>, %arg2: memref<32x256xf32, #tpu.memory_space<vmem>>, %arg3: memref<1x256xf32, #tpu.memory_space<vmem>>, %arg4: memref<2x256xf32, #tpu.memory_space<vmem>>, %arg5: memref<256x4xf32, #tpu.memory_space<vmem>>, %arg6: memref<1x4xf32, #tpu.memory_space<vmem>>, %arg7: memref<2x4xf32, #tpu.memory_space<vmem>>) attributes {dimension_semantics = [], scalar_prefetch = 0 : i64, scratch_operands = 0 : i64, tpu.core_type = #tpu.core_type<tc>} {
    %c0 = arith.constant 0 : index
    %c0_0 = arith.constant 0 : index
    %0 = vector.load %arg1[%c0, %c0_0] : memref<32x128xf32, #tpu.memory_space<vmem>>, vector<32x128xf32>
    %cst = arith.constant 0.000000e+00 : f32
    %1 = vector.broadcast %cst : f32 to vector<2x32xf32>
    %cst_1 = arith.constant 0.000000e+00 : f32
    %2 = vector.broadcast %cst_1 : f32 to vector<2x32xf32>
    %c0_i32 = arith.constant 0 : i32
    %3 = arith.index_cast %c0_i32 : i32 to index
    %c0_2 = arith.constant 0 : index
    %c0_3 = arith.constant 0 : index
    %4 = vector.load %arg0[%3, %c0_2, %c0_3] : memref<8x2x128xf32, #tpu.memory_space<vmem>>, vector<1x2x128xf32>
    %5 = vector.shape_cast %4 : vector<1x2x128xf32> to vector<2x128xf32>
    %cst_4 = arith.constant dense<0.000000e+00> : vector<2x128xf32>
    %6 = tpu.matmul %1, %0, %cst_4 {dimension_numbers = #tpu.dot_dimension_numbers<[1], [0], [0], [1], [0, 0, 1, 1], [], []>} : vector<2x32xf32>, vector<32x128xf32>, vector<2x128xf32> -> vector<2x128xf32>
    %7 = arith.addf %5, %6 : vector<2x128xf32>
    %8 = vector.extract_strided_slice %7 {offsets = [0, 0], sizes = [2, 96], strides = [1, 1]} : vector<2x128xf32> to vector<2x96xf32>
    %9 = arith.negf %8 : vector<2x96xf32>
    %10 = math.exp %9 : vector<2x96xf32>
    %cst_5 = arith.constant 1.000000e+00 : f32
    %11 = vector.broadcast %cst_5 : f32 to vector<2x96xf32>
    %12 = arith.addf %11, %10 : vector<2x96xf32>
    %13 = arith.divf %11, %12 : vector<2x96xf32>
    %14 = vector.extract_strided_slice %7 {offsets = [0, 96], sizes = [2, 32], strides = [1, 1]} : vector<2x128xf32> to vector<2x32xf32>
    %15 = math.tanh %14 : vector<2x32xf32>
    %16 = vector.extract_strided_slice %13 {offsets = [0, 0], sizes = [2, 32], strides = [1, 1]} : vector<2x96xf32> to vector<2x32xf32>
    %17 = vector.extract_strided_slice %13 {offsets = [0, 32], sizes = [2, 32], strides = [1, 1]} : vector<2x96xf32> to vector<2x32xf32>
    %18 = vector.extract_strided_slice %13 {offsets = [0, 64], sizes = [2, 32], strides = [1, 1]} : vector<2x96xf32> to vector<2x32xf32>
    %19 = arith.mulf %17, %2 : vector<2x32xf32>
    %20 = arith.mulf %16, %15 : vector<2x32xf32>
    %21 = arith.addf %19, %20 : vector<2x32xf32>
    %22 = math.tanh %21 : vector<2x32xf32>
    %23 = arith.mulf %18, %22 : vector<2x32xf32>
    %c1_i32 = arith.constant 1 : i32
    %24 = arith.index_cast %c1_i32 : i32 to index
    %c0_6 = arith.constant 0 : index
    %c0_7 = arith.constant 0 : index
    %25 = vector.load %arg0[%24, %c0_6, %c0_7] : memref<8x2x128xf32, #tpu.memory_space<vmem>>, vector<1x2x128xf32>
    %26 = vector.shape_cast %25 : vector<1x2x128xf32> to vector<2x128xf32>
    %cst_8 = arith.constant dense<0.000000e+00> : vector<2x128xf32>
    %27 = tpu.matmul %23, %0, %cst_8 {dimension_numbers = #tpu.dot_dimension_numbers<[1], [0], [0], [1], [0, 0, 1, 1], [], []>} : vector<2x32xf32>, vector<32x128xf32>, vector<2x128xf32> -> vector<2x128xf32>
    %28 = arith.addf %26, %27 : vector<2x128xf32>
    %29 = vector.extract_strided_slice %28 {offsets = [0, 0], sizes = [2, 96], strides = [1, 1]} : vector<2x128xf32> to vector<2x96xf32>
    %30 = arith.negf %29 : vector<2x96xf32>
    %31 = math.exp %30 : vector<2x96xf32>
    %cst_9 = arith.constant 1.000000e+00 : f32
    %32 = vector.broadcast %cst_9 : f32 to vector<2x96xf32>
    %33 = arith.addf %32, %31 : vector<2x96xf32>
    %34 = arith.divf %32, %33 : vector<2x96xf32>
    %35 = vector.extract_strided_slice %28 {offsets = [0, 96], sizes = [2, 32], strides = [1, 1]} : vector<2x128xf32> to vector<2x32xf32>
    %36 = math.tanh %35 : vector<2x32xf32>
    %37 = vector.extract_strided_slice %34 {offsets = [0, 0], sizes = [2, 32], strides = [1, 1]} : vector<2x96xf32> to vector<2x32xf32>
    %38 = vector.extract_strided_slice %34 {offsets = [0, 32], sizes = [2, 32], strides = [1, 1]} : vector<2x96xf32> to vector<2x32xf32>
    %39 = vector.extract_strided_slice %34 {offsets = [0, 64], sizes = [2, 32], strides = [1, 1]} : vector<2x96xf32> to vector<2x32xf32>
    %40 = arith.mulf %38, %21 : vector<2x32xf32>
    %41 = arith.mulf %37, %36 : vector<2x32xf32>
    %42 = arith.addf %40, %41 : vector<2x32xf32>
    %43 = math.tanh %42 : vector<2x32xf32>
    %44 = arith.mulf %39, %43 : vector<2x32xf32>
    %c2_i32 = arith.constant 2 : i32
    %45 = arith.index_cast %c2_i32 : i32 to index
    %c0_10 = arith.constant 0 : index
    %c0_11 = arith.constant 0 : index
    %46 = vector.load %arg0[%45, %c0_10, %c0_11] : memref<8x2x128xf32, #tpu.memory_space<vmem>>, vector<1x2x128xf32>
    %47 = vector.shape_cast %46 : vector<1x2x128xf32> to vector<2x128xf32>
    %cst_12 = arith.constant dense<0.000000e+00> : vector<2x128xf32>
    %48 = tpu.matmul %44, %0, %cst_12 {dimension_numbers = #tpu.dot_dimension_numbers<[1], [0], [0], [1], [0, 0, 1, 1], [], []>} : vector<2x32xf32>, vector<32x128xf32>, vector<2x128xf32> -> vector<2x128xf32>
    %49 = arith.addf %47, %48 : vector<2x128xf32>
    %50 = vector.extract_strided_slice %49 {offsets = [0, 0], sizes = [2, 96], strides = [1, 1]} : vector<2x128xf32> to vector<2x96xf32>
    %51 = arith.negf %50 : vector<2x96xf32>
    %52 = math.exp %51 : vector<2x96xf32>
    %cst_13 = arith.constant 1.000000e+00 : f32
    %53 = vector.broadcast %cst_13 : f32 to vector<2x96xf32>
    %54 = arith.addf %53, %52 : vector<2x96xf32>
    %55 = arith.divf %53, %54 : vector<2x96xf32>
    %56 = vector.extract_strided_slice %49 {offsets = [0, 96], sizes = [2, 32], strides = [1, 1]} : vector<2x128xf32> to vector<2x32xf32>
    %57 = math.tanh %56 : vector<2x32xf32>
    %58 = vector.extract_strided_slice %55 {offsets = [0, 0], sizes = [2, 32], strides = [1, 1]} : vector<2x96xf32> to vector<2x32xf32>
    %59 = vector.extract_strided_slice %55 {offsets = [0, 32], sizes = [2, 32], strides = [1, 1]} : vector<2x96xf32> to vector<2x32xf32>
    %60 = vector.extract_strided_slice %55 {offsets = [0, 64], sizes = [2, 32], strides = [1, 1]} : vector<2x96xf32> to vector<2x32xf32>
    %61 = arith.mulf %59, %42 : vector<2x32xf32>
    %62 = arith.mulf %58, %57 : vector<2x32xf32>
    %63 = arith.addf %61, %62 : vector<2x32xf32>
    %64 = math.tanh %63 : vector<2x32xf32>
    %65 = arith.mulf %60, %64 : vector<2x32xf32>
    %c3_i32 = arith.constant 3 : i32
    %66 = arith.index_cast %c3_i32 : i32 to index
    %c0_14 = arith.constant 0 : index
    %c0_15 = arith.constant 0 : index
    %67 = vector.load %arg0[%66, %c0_14, %c0_15] : memref<8x2x128xf32, #tpu.memory_space<vmem>>, vector<1x2x128xf32>
    %68 = vector.shape_cast %67 : vector<1x2x128xf32> to vector<2x128xf32>
    %cst_16 = arith.constant dense<0.000000e+00> : vector<2x128xf32>
    %69 = tpu.matmul %65, %0, %cst_16 {dimension_numbers = #tpu.dot_dimension_numbers<[1], [0], [0], [1], [0, 0, 1, 1], [], []>} : vector<2x32xf32>, vector<32x128xf32>, vector<2x128xf32> -> vector<2x128xf32>
    %70 = arith.addf %68, %69 : vector<2x128xf32>
    %71 = vector.extract_strided_slice %70 {offsets = [0, 0], sizes = [2, 96], strides = [1, 1]} : vector<2x128xf32> to vector<2x96xf32>
    %72 = arith.negf %71 : vector<2x96xf32>
    %73 = math.exp %72 : vector<2x96xf32>
    %cst_17 = arith.constant 1.000000e+00 : f32
    %74 = vector.broadcast %cst_17 : f32 to vector<2x96xf32>
    %75 = arith.addf %74, %73 : vector<2x96xf32>
    %76 = arith.divf %74, %75 : vector<2x96xf32>
    %77 = vector.extract_strided_slice %70 {offsets = [0, 96], sizes = [2, 32], strides = [1, 1]} : vector<2x128xf32> to vector<2x32xf32>
    %78 = math.tanh %77 : vector<2x32xf32>
    %79 = vector.extract_strided_slice %76 {offsets = [0, 0], sizes = [2, 32], strides = [1, 1]} : vector<2x96xf32> to vector<2x32xf32>
    %80 = vector.extract_strided_slice %76 {offsets = [0, 32], sizes = [2, 32], strides = [1, 1]} : vector<2x96xf32> to vector<2x32xf32>
    %81 = vector.extract_strided_slice %76 {offsets = [0, 64], sizes = [2, 32], strides = [1, 1]} : vector<2x96xf32> to vector<2x32xf32>
    %82 = arith.mulf %80, %63 : vector<2x32xf32>
    %83 = arith.mulf %79, %78 : vector<2x32xf32>
    %84 = arith.addf %82, %83 : vector<2x32xf32>
    %85 = math.tanh %84 : vector<2x32xf32>
    %86 = arith.mulf %81, %85 : vector<2x32xf32>
    %c4_i32 = arith.constant 4 : i32
    %87 = arith.index_cast %c4_i32 : i32 to index
    %c0_18 = arith.constant 0 : index
    %c0_19 = arith.constant 0 : index
    %88 = vector.load %arg0[%87, %c0_18, %c0_19] : memref<8x2x128xf32, #tpu.memory_space<vmem>>, vector<1x2x128xf32>
    %89 = vector.shape_cast %88 : vector<1x2x128xf32> to vector<2x128xf32>
    %cst_20 = arith.constant dense<0.000000e+00> : vector<2x128xf32>
    %90 = tpu.matmul %86, %0, %cst_20 {dimension_numbers = #tpu.dot_dimension_numbers<[1], [0], [0], [1], [0, 0, 1, 1], [], []>} : vector<2x32xf32>, vector<32x128xf32>, vector<2x128xf32> -> vector<2x128xf32>
    %91 = arith.addf %89, %90 : vector<2x128xf32>
    %92 = vector.extract_strided_slice %91 {offsets = [0, 0], sizes = [2, 96], strides = [1, 1]} : vector<2x128xf32> to vector<2x96xf32>
    %93 = arith.negf %92 : vector<2x96xf32>
    %94 = math.exp %93 : vector<2x96xf32>
    %cst_21 = arith.constant 1.000000e+00 : f32
    %95 = vector.broadcast %cst_21 : f32 to vector<2x96xf32>
    %96 = arith.addf %95, %94 : vector<2x96xf32>
    %97 = arith.divf %95, %96 : vector<2x96xf32>
    %98 = vector.extract_strided_slice %91 {offsets = [0, 96], sizes = [2, 32], strides = [1, 1]} : vector<2x128xf32> to vector<2x32xf32>
    %99 = math.tanh %98 : vector<2x32xf32>
    %100 = vector.extract_strided_slice %97 {offsets = [0, 0], sizes = [2, 32], strides = [1, 1]} : vector<2x96xf32> to vector<2x32xf32>
    %101 = vector.extract_strided_slice %97 {offsets = [0, 32], sizes = [2, 32], strides = [1, 1]} : vector<2x96xf32> to vector<2x32xf32>
    %102 = vector.extract_strided_slice %97 {offsets = [0, 64], sizes = [2, 32], strides = [1, 1]} : vector<2x96xf32> to vector<2x32xf32>
    %103 = arith.mulf %101, %84 : vector<2x32xf32>
    %104 = arith.mulf %100, %99 : vector<2x32xf32>
    %105 = arith.addf %103, %104 : vector<2x32xf32>
    %106 = math.tanh %105 : vector<2x32xf32>
    %107 = arith.mulf %102, %106 : vector<2x32xf32>
    %c5_i32 = arith.constant 5 : i32
    %108 = arith.index_cast %c5_i32 : i32 to index
    %c0_22 = arith.constant 0 : index
    %c0_23 = arith.constant 0 : index
    %109 = vector.load %arg0[%108, %c0_22, %c0_23] : memref<8x2x128xf32, #tpu.memory_space<vmem>>, vector<1x2x128xf32>
    %110 = vector.shape_cast %109 : vector<1x2x128xf32> to vector<2x128xf32>
    %cst_24 = arith.constant dense<0.000000e+00> : vector<2x128xf32>
    %111 = tpu.matmul %107, %0, %cst_24 {dimension_numbers = #tpu.dot_dimension_numbers<[1], [0], [0], [1], [0, 0, 1, 1], [], []>} : vector<2x32xf32>, vector<32x128xf32>, vector<2x128xf32> -> vector<2x128xf32>
    %112 = arith.addf %110, %111 : vector<2x128xf32>
    %113 = vector.extract_strided_slice %112 {offsets = [0, 0], sizes = [2, 96], strides = [1, 1]} : vector<2x128xf32> to vector<2x96xf32>
    %114 = arith.negf %113 : vector<2x96xf32>
    %115 = math.exp %114 : vector<2x96xf32>
    %cst_25 = arith.constant 1.000000e+00 : f32
    %116 = vector.broadcast %cst_25 : f32 to vector<2x96xf32>
    %117 = arith.addf %116, %115 : vector<2x96xf32>
    %118 = arith.divf %116, %117 : vector<2x96xf32>
    %119 = vector.extract_strided_slice %112 {offsets = [0, 96], sizes = [2, 32], strides = [1, 1]} : vector<2x128xf32> to vector<2x32xf32>
    %120 = math.tanh %119 : vector<2x32xf32>
    %121 = vector.extract_strided_slice %118 {offsets = [0, 0], sizes = [2, 32], strides = [1, 1]} : vector<2x96xf32> to vector<2x32xf32>
    %122 = vector.extract_strided_slice %118 {offsets = [0, 32], sizes = [2, 32], strides = [1, 1]} : vector<2x96xf32> to vector<2x32xf32>
    %123 = vector.extract_strided_slice %118 {offsets = [0, 64], sizes = [2, 32], strides = [1, 1]} : vector<2x96xf32> to vector<2x32xf32>
    %124 = arith.mulf %122, %105 : vector<2x32xf32>
    %125 = arith.mulf %121, %120 : vector<2x32xf32>
    %126 = arith.addf %124, %125 : vector<2x32xf32>
    %127 = math.tanh %126 : vector<2x32xf32>
    %128 = arith.mulf %123, %127 : vector<2x32xf32>
    %c6_i32 = arith.constant 6 : i32
    %129 = arith.index_cast %c6_i32 : i32 to index
    %c0_26 = arith.constant 0 : index
    %c0_27 = arith.constant 0 : index
    %130 = vector.load %arg0[%129, %c0_26, %c0_27] : memref<8x2x128xf32, #tpu.memory_space<vmem>>, vector<1x2x128xf32>
    %131 = vector.shape_cast %130 : vector<1x2x128xf32> to vector<2x128xf32>
    %cst_28 = arith.constant dense<0.000000e+00> : vector<2x128xf32>
    %132 = tpu.matmul %128, %0, %cst_28 {dimension_numbers = #tpu.dot_dimension_numbers<[1], [0], [0], [1], [0, 0, 1, 1], [], []>} : vector<2x32xf32>, vector<32x128xf32>, vector<2x128xf32> -> vector<2x128xf32>
    %133 = arith.addf %131, %132 : vector<2x128xf32>
    %134 = vector.extract_strided_slice %133 {offsets = [0, 0], sizes = [2, 96], strides = [1, 1]} : vector<2x128xf32> to vector<2x96xf32>
    %135 = arith.negf %134 : vector<2x96xf32>
    %136 = math.exp %135 : vector<2x96xf32>
    %cst_29 = arith.constant 1.000000e+00 : f32
    %137 = vector.broadcast %cst_29 : f32 to vector<2x96xf32>
    %138 = arith.addf %137, %136 : vector<2x96xf32>
    %139 = arith.divf %137, %138 : vector<2x96xf32>
    %140 = vector.extract_strided_slice %133 {offsets = [0, 96], sizes = [2, 32], strides = [1, 1]} : vector<2x128xf32> to vector<2x32xf32>
    %141 = math.tanh %140 : vector<2x32xf32>
    %142 = vector.extract_strided_slice %139 {offsets = [0, 0], sizes = [2, 32], strides = [1, 1]} : vector<2x96xf32> to vector<2x32xf32>
    %143 = vector.extract_strided_slice %139 {offsets = [0, 32], sizes = [2, 32], strides = [1, 1]} : vector<2x96xf32> to vector<2x32xf32>
    %144 = vector.extract_strided_slice %139 {offsets = [0, 64], sizes = [2, 32], strides = [1, 1]} : vector<2x96xf32> to vector<2x32xf32>
    %145 = arith.mulf %143, %126 : vector<2x32xf32>
    %146 = arith.mulf %142, %141 : vector<2x32xf32>
    %147 = arith.addf %145, %146 : vector<2x32xf32>
    %148 = math.tanh %147 : vector<2x32xf32>
    %149 = arith.mulf %144, %148 : vector<2x32xf32>
    %c7_i32 = arith.constant 7 : i32
    %150 = arith.index_cast %c7_i32 : i32 to index
    %c0_30 = arith.constant 0 : index
    %c0_31 = arith.constant 0 : index
    %151 = vector.load %arg0[%150, %c0_30, %c0_31] : memref<8x2x128xf32, #tpu.memory_space<vmem>>, vector<1x2x128xf32>
    %152 = vector.shape_cast %151 : vector<1x2x128xf32> to vector<2x128xf32>
    %cst_32 = arith.constant dense<0.000000e+00> : vector<2x128xf32>
    %153 = tpu.matmul %149, %0, %cst_32 {dimension_numbers = #tpu.dot_dimension_numbers<[1], [0], [0], [1], [0, 0, 1, 1], [], []>} : vector<2x32xf32>, vector<32x128xf32>, vector<2x128xf32> -> vector<2x128xf32>
    %154 = arith.addf %152, %153 : vector<2x128xf32>
    %155 = vector.extract_strided_slice %154 {offsets = [0, 0], sizes = [2, 96], strides = [1, 1]} : vector<2x128xf32> to vector<2x96xf32>
    %156 = arith.negf %155 : vector<2x96xf32>
    %157 = math.exp %156 : vector<2x96xf32>
    %cst_33 = arith.constant 1.000000e+00 : f32
    %158 = vector.broadcast %cst_33 : f32 to vector<2x96xf32>
    %159 = arith.addf %158, %157 : vector<2x96xf32>
    %160 = arith.divf %158, %159 : vector<2x96xf32>
    %161 = vector.extract_strided_slice %154 {offsets = [0, 96], sizes = [2, 32], strides = [1, 1]} : vector<2x128xf32> to vector<2x32xf32>
    %162 = math.tanh %161 : vector<2x32xf32>
    %163 = vector.extract_strided_slice %160 {offsets = [0, 0], sizes = [2, 32], strides = [1, 1]} : vector<2x96xf32> to vector<2x32xf32>
    %164 = vector.extract_strided_slice %160 {offsets = [0, 32], sizes = [2, 32], strides = [1, 1]} : vector<2x96xf32> to vector<2x32xf32>
    %165 = vector.extract_strided_slice %160 {offsets = [0, 64], sizes = [2, 32], strides = [1, 1]} : vector<2x96xf32> to vector<2x32xf32>
    %166 = arith.mulf %164, %147 : vector<2x32xf32>
    %167 = arith.mulf %163, %162 : vector<2x32xf32>
    %168 = arith.addf %166, %167 : vector<2x32xf32>
    %169 = math.tanh %168 : vector<2x32xf32>
    %170 = arith.mulf %165, %169 : vector<2x32xf32>
    %c8_i32 = arith.constant 8 : i32
    %c0_34 = arith.constant 0 : index
    %c0_35 = arith.constant 0 : index
    %171 = vector.load %arg2[%c0_34, %c0_35] : memref<32x256xf32, #tpu.memory_space<vmem>>, vector<32x256xf32>
    %cst_36 = arith.constant dense<0.000000e+00> : vector<2x256xf32>
    %172 = tpu.matmul %170, %171, %cst_36 {dimension_numbers = #tpu.dot_dimension_numbers<[1], [0], [0], [1], [0, 0, 1, 1], [], []>} : vector<2x32xf32>, vector<32x256xf32>, vector<2x256xf32> -> vector<2x256xf32>
    %c0_37 = arith.constant 0 : index
    %c0_38 = arith.constant 0 : index
    %173 = vector.load %arg3[%c0_37, %c0_38] : memref<1x256xf32, #tpu.memory_space<vmem>>, vector<1x256xf32>
    %174 = vector.broadcast %173 : vector<1x256xf32> to vector<2x256xf32>
    %175 = arith.addf %172, %174 : vector<2x256xf32>
    %cst_39 = arith.constant 0.000000e+00 : f32
    %176 = vector.broadcast %cst_39 : f32 to vector<2x256xf32>
    %177 = arith.maximumf %175, %176 : vector<2x256xf32>
    %c0_40 = arith.constant 0 : index
    %c0_41 = arith.constant 0 : index
    %178 = vector.load %arg4[%c0_40, %c0_41] : memref<2x256xf32, #tpu.memory_space<vmem>>, vector<2x256xf32>
    %179 = arith.mulf %177, %178 : vector<2x256xf32>
    %c0_42 = arith.constant 0 : index
    %c0_43 = arith.constant 0 : index
    %180 = vector.load %arg5[%c0_42, %c0_43] : memref<256x4xf32, #tpu.memory_space<vmem>>, vector<256x4xf32>
    %cst_44 = arith.constant dense<0.000000e+00> : vector<2x4xf32>
    %181 = tpu.matmul %179, %180, %cst_44 {dimension_numbers = #tpu.dot_dimension_numbers<[1], [0], [0], [1], [0, 0, 1, 1], [], []>} : vector<2x256xf32>, vector<256x4xf32>, vector<2x4xf32> -> vector<2x4xf32>
    %c0_45 = arith.constant 0 : index
    %c0_46 = arith.constant 0 : index
    %182 = vector.load %arg6[%c0_45, %c0_46] : memref<1x4xf32, #tpu.memory_space<vmem>>, vector<1x4xf32>
    %183 = vector.broadcast %182 : vector<1x4xf32> to vector<2x4xf32>
    %184 = arith.addf %181, %183 : vector<2x4xf32>
    %185 = arith.negf %184 : vector<2x4xf32>
    %186 = math.exp %185 : vector<2x4xf32>
    %cst_47 = arith.constant 1.000000e+00 : f32
    %187 = vector.broadcast %cst_47 : f32 to vector<2x4xf32>
    %188 = arith.addf %187, %186 : vector<2x4xf32>
    %189 = arith.divf %187, %188 : vector<2x4xf32>
    %c0_48 = arith.constant 0 : index
    %c0_49 = arith.constant 0 : index
    %190 = vector.load %arg7[%c0_48, %c0_49] : memref<2x4xf32, #tpu.memory_space<vmem>>, vector<2x4xf32>
    tpu.vector_store %arg7[%c0_48, %c0_49], %189 {strides = array<i32>} : memref<2x4xf32, #tpu.memory_space<vmem>>, vector<2x4xf32>,
    return
  }
}

</mosaic_0001>

<llo_original>
// kernel: lstm_v2_forward.1
$region0: #{lstm_v2_forward.1}
  #allocation0 [shape = 'u32[]', space=smem, size = 0x4, offset = 0x4, fixed_abs, tag = 'smem constant byte address 0x4 - core index']
  #allocation1 [shape = 'u32[144,128]{1,0:T(1,128)}', space=vmem, size = 0x12000, scoped, tag = 'internal scratch']
  %s0 = inlined_call_operand.vmem [shape: f32[8,2,128], index: 0, kind: input, shape index: {}]
  %s1 = inlined_call_operand.vmem [shape: f32[32,128], index: 1, kind: input, shape index: {}]
  %s2 = inlined_call_operand.vmem [shape: f32[32,256], index: 2, kind: input, shape index: {}]
  %s3 = inlined_call_operand.vmem [shape: f32[1,256], index: 3, kind: input, shape index: {}]
  %s4 = inlined_call_operand.vmem [shape: f32[2,256], index: 4, kind: input, shape index: {}]
  %s5 = inlined_call_operand.vmem [shape: f32[256,4], index: 5, kind: input, shape index: {}]
  %s6 = inlined_call_operand.vmem [shape: f32[1,4], index: 6, kind: input, shape index: {}]
  %s7 = inlined_call_operand.hbm [shape: f32[2,4], index: 7, kind: output, shape index: {}]
  %s8 = sld [smem:[#allocation0]]
  $region38: #{lstm_v2_forward.1} parent=0
    _
  %s10 = ssub.s32 1, %s8
  %s11 = scalar_select 0, %s10, %s8
  $region1: #{lstm_v2_forward.1} parent=0
    #allocation2 [shape = 'u8[1024]{0}', space=vmem, size = 0x400, scoped, tag = 'output window, operand 0, single buffered']
    #allocation3 [shape = 's32[1]{0}', space=sflag, size = 0x4, scoped, tag = 'scoped memory for lstm_v2_forward.1']
    %12 = vsyncpa [#allocation3], 0
    // Predicated region
    $region2: #{lstm_v2_forward.1} parent=1 // pred_check
      _
    $region3: #{lstm_v2_forward.1} parent=1 // pred_check_branch
      %14 = sbr.rel (0) target = $region5
    $region4: #{lstm_v2_forward.1} parent=1 // pred_region
      _
    $region5: #{lstm_v2_forward.1} parent=1 // pred_fallthru
      _
    // Predicated region
    $region6: #{lstm_v2_forward.1} parent=1 // pred_check
      _
    $region7: #{lstm_v2_forward.1} parent=1 // pred_check_branch
      %16 = sbr.rel (0) target = $region9
    $region8: #{lstm_v2_forward.1} parent=1 // pred_region
      _
    $region9: #{lstm_v2_forward.1} parent=1 // pred_fallthru
      _
    // Predicated region
    $region10: #{lstm_v2_forward.1} parent=1 // pred_check
      _
    $region11: #{lstm_v2_forward.1} parent=1 // pred_check_branch
      %18 = sbr.rel (0) target = $region13
    $region12: #{lstm_v2_forward.1} parent=1 // pred_region
      _
    $region13: #{lstm_v2_forward.1} parent=1 // pred_fallthru
      _
    // Predicated region
    $region14: #{lstm_v2_forward.1} parent=1 // pred_check
      _
    $region15: #{lstm_v2_forward.1} parent=1 // pred_check_branch
      %20 = sbr.rel (0) target = $region17
    $region16: #{lstm_v2_forward.1} parent=1 // pred_region
      _
    $region17: #{lstm_v2_forward.1} parent=1 // pred_fallthru
      _
    // Predicated region
    $region18: #{lstm_v2_forward.1} parent=1 // pred_check
      _
    $region19: #{lstm_v2_forward.1} parent=1 // pred_check_branch
      %22 = sbr.rel (0) target = $region21
    $region20: #{lstm_v2_forward.1} parent=1 // pred_region
      _
    $region21: #{lstm_v2_forward.1} parent=1 // pred_fallthru
      _
    // Predicated region
    $region22: #{lstm_v2_forward.1} parent=1 // pred_check
      _
    $region23: #{lstm_v2_forward.1} parent=1 // pred_check_branch
      %24 = sbr.rel (0) target = $region25
    $region24: #{lstm_v2_forward.1} parent=1 // pred_region
      _
    $region25: #{lstm_v2_forward.1} parent=1 // pred_fallthru
      _
    // Predicated region
    $region26: #{lstm_v2_forward.1} parent=1 // pred_check
      _
    $region27: #{lstm_v2_forward.1} parent=1 // pred_check_branch
      %26 = sbr.rel (0) target = $region29
    $region28: #{lstm_v2_forward.1} parent=1 // pred_region
      _
    $region29: #{lstm_v2_forward.1} parent=1 // pred_fallthru
      _
    %v27 = vld [vmem:[%s1] sm:$0xff]
    %v28 = vld [vmem:[%s1 + $0x8] sm:$0xff]
    %v29 = vld [vmem:[%s1 + $0x10] sm:$0xff]
    %v30 = vld [vmem:[%s1 + $0x18] sm:$0xff]
    %v31 = vld [vmem:[%s0] sm:$0x3]
    %vm32 = vcmask 261120
    %v34 = vsel %vm32, 0.0, 0
    %36 = vmatprep.subr.mxu0 0.0
    %37 = vmatpush1.msra.mxu0 0.0
    %38 = vmatprep.subr.mxu0 0.0
    %39 = vmatpush1.msra.mxu0 0.0
    %40 = vmatprep.subr.mxu0 0.0
    %41 = vmatpush1.msra.mxu0 0.0
    %42 = vmatprep.subr.mxu0 0.0
    %43 = vmatpush1.msra.mxu0 0.0
    %44 = vmatprep.subr.mxu0 0.0
    %45 = vmatpush1.msra.mxu0 0.0
    %46 = vmatprep.subr.mxu0 0.0
    %47 = vmatpush1.msra.mxu0 0.0
    %48 = vmatprep.subr.mxu0 0.0
    %49 = vmatpush1.msra.mxu0 0.0
    %50 = vmatprep.subr.mxu0 0.0
    %51 = vmatpush1.msra.mxu0 0.0
    %52 = vmatprep.subr.mxu0 0.0
    %53 = vmatpush1.msra.mxu0 0.0
    %54 = vmatprep.subr.mxu0 0.0
    %55 = vmatpush1.msra.mxu0 0.0
    %56 = vmatprep.subr.mxu0 0.0
    %57 = vmatpush1.msra.mxu0 0.0
    %58 = vmatprep.subr.mxu0 0.0
    %59 = vmatpush1.msra.mxu0 0.0
    %60 = vmatprep.subr.mxu0 0.0
    %61 = vmatpush1.msra.mxu0 %v30
    %62 = vmatprep.subr.mxu0 0.0
    %63 = vmatpush1.msra.mxu0 %v29
    %64 = vmatprep.subr.mxu0 0.0
    %65 = vmatpush1.msra.mxu0 %v28
    %66 = vmatprep.subr.mxu0 0.0
    %67 = vmatpush1.msra.mxu0 %v27
    %68 = vmatprep.subr.mxu0 0.0
    %69 = vmatpush2.msra.mxu0 0.0
    %70 = vmatprep.subr.mxu0 0.0
    %71 = vmatpush2.msra.mxu0 0.0
    %72 = vmatprep.subr.mxu0 0.0
    %73 = vmatpush2.msra.mxu0 0.0
    %74 = vmatprep.subr.mxu0 0.0
    %75 = vmatpush2.msra.mxu0 0.0
    %76 = vmatprep.subr.mxu0 0.0
    %77 = vmatpush2.msra.mxu0 0.0
    %78 = vmatprep.subr.mxu0 0.0
    %79 = vmatpush2.msra.mxu0 0.0
    %80 = vmatprep.subr.mxu0 0.0
    %81 = vmatpush2.msra.mxu0 0.0
    %82 = vmatprep.subr.mxu0 0.0
    %83 = vmatpush2.msra.mxu0 0.0
    %84 = vmatprep.subr.mxu0 0.0
    %85 = vmatpush2.msra.mxu0 0.0
    %86 = vmatprep.subr.mxu0 0.0
    %87 = vmatpush2.msra.mxu0 0.0
    %88 = vmatprep.subr.mxu0 0.0
    %89 = vmatpush2.msra.mxu0 0.0
    %90 = vmatprep.subr.mxu0 0.0
    %91 = vmatpush2.msra.mxu0 0.0
    %92 = vmatprep.subr.mxu0 0.0
    %93 = vmatpush2.msra.mxu0 0.0
    %94 = vmatprep.subr.mxu0 0.0
    %95 = vmatpush2.msra.mxu0 0.0
    %96 = vmatprep.subr.mxu0 0.0
    %97 = vmatpush2.msra.mxu0 0.0
    %98 = vmatprep.subr.mxu0 0.0
    %99 = vmatpush2.msra.mxu0 0.0
    %100 = vmatprep.mubr.f32.mxu0 0.0
    %101 = vmatmul.mubr.f32.gmra.mxu0 %v34
    %v102 = vpop.f32.mrf.mxu0
    %v103 = vadd.f32 0.0, %v102
    %v104 = vpop.f32.mrf.mxu0
    %105 = vdwg.mxu0
    %v106 = vadd.f32 %v31, %v103
    %v107 = vxor.u32 %v106, 2147483648
    %v108 = vmul.f32 %v107, 1.442695
    %v109 = vpow.pop %v108
    %v110 = vadd.f32 %v109, 1.0
    %v111 = vrcp.pop %v110
    %v112 = vmul.f32 1.0, %v111
    %v113 = vtanh.pop %v106
    %v114 = vmul.f32 %v112, 0.0
    %116 = vrot.lane.b32.xlu0 %v113, 32
    %v117 = vpop.permute.xlu0 %116
    %v119 = vmul.f32 %v112, %v117
    %121 = vrot.lane.b32.xlu0 %v119, 32
    %v122 = vpop.permute.xlu0 %121
    %v124 = vadd.f32 %v114, %v122
    %v125 = vtanh.pop %v124
    %127 = vrot.lane.b32.xlu0 %v125, 32
    %v128 = vpop.permute.xlu0 %127
    %v130 = vmul.f32 %v112, %v128
    %s131 = scalar_lea.vmem %s0, 2
    %v132 = vld [vmem:[%s131] sm:$0x3]
    %134 = vrot.lane.b32.xlu0 %v130, 64
    %v135 = vpop.permute.xlu0 %134
    %v136 = vsel %vm32, %v135, 0
    %138 = vmatprep.subr.mxu0 0.0
    %139 = vmatpush1.msra.mxu0 0.0
    %140 = vmatprep.subr.mxu0 0.0
    %141 = vmatpush1.msra.mxu0 0.0
    %142 = vmatprep.subr.mxu0 0.0
    %143 = vmatpush1.msra.mxu0 0.0
    %144 = vmatprep.subr.mxu0 0.0
    %145 = vmatpush1.msra.mxu0 0.0
    %146 = vmatprep.subr.mxu0 0.0
    %147 = vmatpush1.msra.mxu0 0.0
    %148 = vmatprep.subr.mxu0 0.0
    %149 = vmatpush1.msra.mxu0 0.0
    %150 = vmatprep.subr.mxu0 0.0
    %151 = vmatpush1.msra.mxu0 0.0
    %152 = vmatprep.subr.mxu0 0.0
    %153 = vmatpush1.msra.mxu0 0.0
    %154 = vmatprep.subr.mxu0 0.0
    %155 = vmatpush1.msra.mxu0 0.0
    %156 = vmatprep.subr.mxu0 0.0
    %157 = vmatpush1.msra.mxu0 0.0
    %158 = vmatprep.subr.mxu0 0.0
    %159 = vmatpush1.msra.mxu0 0.0
    %160 = vmatprep.subr.mxu0 0.0
    %161 = vmatpush1.msra.mxu0 0.0
    %162 = vmatprep.subr.mxu0 0.0
    %163 = vmatpush1.msra.mxu0 %v30
    %164 = vmatprep.subr.mxu0 0.0
    %165 = vmatpush1.msra.mxu0 %v29
    %166 = vmatprep.subr.mxu0 0.0
    %167 = vmatpush1.msra.mxu0 %v28
    %168 = vmatprep.subr.mxu0 0.0
    %169 = vmatpush1.msra.mxu0 %v27
    %170 = vmatprep.subr.mxu0 0.0
    %171 = vmatpush2.msra.mxu0 0.0
    %172 = vmatprep.subr.mxu0 0.0
    %173 = vmatpush2.msra.mxu0 0.0
    %174 = vmatprep.subr.mxu0 0.0
    %175 = vmatpush2.msra.mxu0 0.0
    %176 = vmatprep.subr.mxu0 0.0
    %177 = vmatpush2.msra.mxu0 0.0
    %178 = vmatprep.subr.mxu0 0.0
    %179 = vmatpush2.msra.mxu0 0.0
    %180 = vmatprep.subr.mxu0 0.0
    %181 = vmatpush2.msra.mxu0 0.0
    %182 = vmatprep.subr.mxu0 0.0
    %183 = vmatpush2.msra.mxu0 0.0
    %184 = vmatprep.subr.mxu0 0.0
    %185 = vmatpush2.msra.mxu0 0.0
    %186 = vmatprep.subr.mxu0 0.0
    %187 = vmatpush2.msra.mxu0 0.0
    %188 = vmatprep.subr.mxu0 0.0
    %189 = vmatpush2.msra.mxu0 0.0
    %190 = vmatprep.subr.mxu0 0.0
    %191 = vmatpush2.msra.mxu0 0.0
    %192 = vmatprep.subr.mxu0 0.0
    %193 = vmatpush2.msra.mxu0 0.0
    %194 = vmatprep.subr.mxu0 0.0
    %195 = vmatpush2.msra.mxu0 0.0
    %196 = vmatprep.subr.mxu0 0.0
    %197 = vmatpush2.msra.mxu0 0.0
    %198 = vmatprep.subr.mxu0 0.0
    %199 = vmatpush2.msra.mxu0 0.0
    %200 = vmatprep.subr.mxu0 0.0
    %201 = vmatpush2.msra.mxu0 0.0
    %202 = vmatprep.mubr.f32.mxu0 0.0
    %203 = vmatmul.mubr.f32.gmra.mxu0 %v136
    %v204 = vpop.f32.mrf.mxu0
    %v205 = vadd.f32 0.0, %v204
    %v206 = vpop.f32.mrf.mxu0
    %207 = vdwg.mxu0
    %v208 = vadd.f32 %v132, %v205
    %v209 = vxor.u32 %v208, 2147483648
    %v210 = vmul.f32 %v209, 1.442695
    %v211 = vpow.pop %v210
    %v212 = vadd.f32 %v211, 1.0
    %v213 = vrcp.pop %v212
    %v214 = vmul.f32 1.0, %v213
    %v215 = vtanh.pop %v208
    %v216 = vmul.f32 %v214, %v124
    %218 = vrot.lane.b32.xlu0 %v215, 32
    %v219 = vpop.permute.xlu0 %218
    %v221 = vmul.f32 %v214, %v219
    %223 = vrot.lane.b32.xlu0 %v221, 32
    %v224 = vpop.permute.xlu0 %223
    %v226 = vadd.f32 %v216, %v224
    %v227 = vtanh.pop %v226
    %229 = vrot.lane.b32.xlu0 %v227, 32
    %v230 = vpop.permute.xlu0 %229
    %v232 = vmul.f32 %v214, %v230
    %s233 = scalar_lea.vmem %s0, 4
    %v234 = vld [vmem:[%s233] sm:$0x3]
    %236 = vrot.lane.b32.xlu0 %v232, 64
    %v237 = vpop.permute.xlu0 %236
    %v238 = vsel %vm32, %v237, 0
    %240 = vmatprep.subr.mxu0 0.0
    %241 = vmatpush1.msra.mxu0 0.0
    %242 = vmatprep.subr.mxu0 0.0
    %243 = vmatpush1.msra.mxu0 0.0
    %244 = vmatprep.subr.mxu0 0.0
    %245 = vmatpush1.msra.mxu0 0.0
    %246 = vmatprep.subr.mxu0 0.0
    %247 = vmatpush1.msra.mxu0 0.0
    %248 = vmatprep.subr.mxu0 0.0
    %249 = vmatpush1.msra.mxu0 0.0
    %250 = vmatprep.subr.mxu0 0.0
    %251 = vmatpush1.msra.mxu0 0.0
    %252 = vmatprep.subr.mxu0 0.0
    %253 = vmatpush1.msra.mxu0 0.0
    %254 = vmatprep.subr.mxu0 0.0
    %255 = vmatpush1.msra.mxu0 0.0
    %256 = vmatprep.subr.mxu0 0.0
    %257 = vmatpush1.msra.mxu0 0.0
    %258 = vmatprep.subr.mxu0 0.0
    %259 = vmatpush1.msra.mxu0 0.0
    %260 = vmatprep.subr.mxu0 0.0
    %261 = vmatpush1.msra.mxu0 0.0
    %262 = vmatprep.subr.mxu0 0.0
    %263 = vmatpush1.msra.mxu0 0.0
    %264 = vmatprep.subr.mxu0 0.0
    %265 = vmatpush1.msra.mxu0 %v30
    %266 = vmatprep.subr.mxu0 0.0
    %267 = vmatpush1.msra.mxu0 %v29
    %268 = vmatprep.subr.mxu0 0.0
    %269 = vmatpush1.msra.mxu0 %v28
    %270 = vmatprep.subr.mxu0 0.0
    %271 = vmatpush1.msra.mxu0 %v27
    %272 = vmatprep.subr.mxu0 0.0
    %273 = vmatpush2.msra.mxu0 0.0
    %274 = vmatprep.subr.mxu0 0.0
    %275 = vmatpush2.msra.mxu0 0.0
    %276 = vmatprep.subr.mxu0 0.0
    %277 = vmatpush2.msra.mxu0 0.0
    %278 = vmatprep.subr.mxu0 0.0
    %279 = vmatpush2.msra.mxu0 0.0
    %280 = vmatprep.subr.mxu0 0.0
    %281 = vmatpush2.msra.mxu0 0.0
    %282 = vmatprep.subr.mxu0 0.0
    %283 = vmatpush2.msra.mxu0 0.0
    %284 = vmatprep.subr.mxu0 0.0
    %285 = vmatpush2.msra.mxu0 0.0
    %286 = vmatprep.subr.mxu0 0.0
    %287 = vmatpush2.msra.mxu0 0.0
    %288 = vmatprep.subr.mxu0 0.0
    %289 = vmatpush2.msra.mxu0 0.0
    %290 = vmatprep.subr.mxu0 0.0
    %291 = vmatpush2.msra.mxu0 0.0
    %292 = vmatprep.subr.mxu0 0.0
    %293 = vmatpush2.msra.mxu0 0.0
    %294 = vmatprep.subr.mxu0 0.0
    %295 = vmatpush2.msra.mxu0 0.0
    %296 = vmatprep.subr.mxu0 0.0
    %297 = vmatpush2.msra.mxu0 0.0
    %298 = vmatprep.subr.mxu0 0.0
    %299 = vmatpush2.msra.mxu0 0.0
    %300 = vmatprep.subr.mxu0 0.0
    %301 = vmatpush2.msra.mxu0 0.0
    %302 = vmatprep.subr.mxu0 0.0
    %303 = vmatpush2.msra.mxu0 0.0
    %304 = vmatprep.mubr.f32.mxu0 0.0
    %305 = vmatmul.mubr.f32.gmra.mxu0 %v238
    %v306 = vpop.f32.mrf.mxu0
    %v307 = vadd.f32 0.0, %v306
    %v308 = vpop.f32.mrf.mxu0
    %309 = vdwg.mxu0
    %v310 = vadd.f32 %v234, %v307
    %v311 = vxor.u32 %v310, 2147483648
    %v312 = vmul.f32 %v311, 1.442695
    %v313 = vpow.pop %v312
    %v314 = vadd.f32 %v313, 1.0
    %v315 = vrcp.pop %v314
    %v316 = vmul.f32 1.0, %v315
    %v317 = vtanh.pop %v310
    %v318 = vmul.f32 %v316, %v226
    %320 = vrot.lane.b32.xlu0 %v317, 32
    %v321 = vpop.permute.xlu0 %320
    %v323 = vmul.f32 %v316, %v321
    %325 = vrot.lane.b32.xlu0 %v323, 32
    %v326 = vpop.permute.xlu0 %325
    %v328 = vadd.f32 %v318, %v326
    %v329 = vtanh.pop %v328
    %331 = vrot.lane.b32.xlu0 %v329, 32
    %v332 = vpop.permute.xlu0 %331
    %v334 = vmul.f32 %v316, %v332
    %s335 = scalar_lea.vmem %s0, 6
    %v336 = vld [vmem:[%s335] sm:$0x3]
    %338 = vrot.lane.b32.xlu0 %v334, 64
    %v339 = vpop.permute.xlu0 %338
    %v340 = vsel %vm32, %v339, 0
    %342 = vmatprep.subr.mxu0 0.0
    %343 = vmatpush1.msra.mxu0 0.0
    %344 = vmatprep.subr.mxu0 0.0
    %345 = vmatpush1.msra.mxu0 0.0
    %346 = vmatprep.subr.mxu0 0.0
    %347 = vmatpush1.msra.mxu0 0.0
    %348 = vmatprep.subr.mxu0 0.0
    %349 = vmatpush1.msra.mxu0 0.0
    %350 = vmatprep.subr.mxu0 0.0
    %351 = vmatpush1.msra.mxu0 0.0
    %352 = vmatprep.subr.mxu0 0.0
    %353 = vmatpush1.msra.mxu0 0.0
    %354 = vmatprep.subr.mxu0 0.0
    %355 = vmatpush1.msra.mxu0 0.0
    %356 = vmatprep.subr.mxu0 0.0
    %357 = vmatpush1.msra.mxu0 0.0
    %358 = vmatprep.subr.mxu0 0.0
    %359 = vmatpush1.msra.mxu0 0.0
    %360 = vmatprep.subr.mxu0 0.0
    %361 = vmatpush1.msra.mxu0 0.0
    %362 = vmatprep.subr.mxu0 0.0
    %363 = vmatpush1.msra.mxu0 0.0
    %364 = vmatprep.subr.mxu0 0.0
    %365 = vmatpush1.msra.mxu0 0.0
    %366 = vmatprep.subr.mxu0 0.0
    %367 = vmatpush1.msra.mxu0 %v30
    %368 = vmatprep.subr.mxu0 0.0
    %369 = vmatpush1.msra.mxu0 %v29
    %370 = vmatprep.subr.mxu0 0.0
    %371 = vmatpush1.msra.mxu0 %v28
    %372 = vmatprep.subr.mxu0 0.0
    %373 = vmatpush1.msra.mxu0 %v27
    %374 = vmatprep.subr.mxu0 0.0
    %375 = vmatpush2.msra.mxu0 0.0
    %376 = vmatprep.subr.mxu0 0.0
    %377 = vmatpush2.msra.mxu0 0.0
    %378 = vmatprep.subr.mxu0 0.0
    %379 = vmatpush2.msra.mxu0 0.0
    %380 = vmatprep.subr.mxu0 0.0
    %381 = vmatpush2.msra.mxu0 0.0
    %382 = vmatprep.subr.mxu0 0.0
    %383 = vmatpush2.msra.mxu0 0.0
    %384 = vmatprep.subr.mxu0 0.0
    %385 = vmatpush2.msra.mxu0 0.0
    %386 = vmatprep.subr.mxu0 0.0
    %387 = vmatpush2.msra.mxu0 0.0
    %388 = vmatprep.subr.mxu0 0.0
    %389 = vmatpush2.msra.mxu0 0.0
    %390 = vmatprep.subr.mxu0 0.0
    %391 = vmatpush2.msra.mxu0 0.0
    %392 = vmatprep.subr.mxu0 0.0
    %393 = vmatpush2.msra.mxu0 0.0
    %394 = vmatprep.subr.mxu0 0.0
    %395 = vmatpush2.msra.mxu0 0.0
    %396 = vmatprep.subr.mxu0 0.0
    %397 = vmatpush2.msra.mxu0 0.0
    %398 = vmatprep.subr.mxu0 0.0
    %399 = vmatpush2.msra.mxu0 0.0
    %400 = vmatprep.subr.mxu0 0.0
    %401 = vmatpush2.msra.mxu0 0.0
    %402 = vmatprep.subr.mxu0 0.0
    %403 = vmatpush2.msra.mxu0 0.0
    %404 = vmatprep.subr.mxu0 0.0
    %405 = vmatpush2.msra.mxu0 0.0
    %406 = vmatprep.mubr.f32.mxu0 0.0
    %407 = vmatmul.mubr.f32.gmra.mxu0 %v340
    %v408 = vpop.f32.mrf.mxu0
    %v409 = vadd.f32 0.0, %v408
    %v410 = vpop.f32.mrf.mxu0
    %411 = vdwg.mxu0
    %v412 = vadd.f32 %v336, %v409
    %v413 = vxor.u32 %v412, 2147483648
    %v414 = vmul.f32 %v413, 1.442695
    %v415 = vpow.pop %v414
    %v416 = vadd.f32 %v415, 1.0
    %v417 = vrcp.pop %v416
    %v418 = vmul.f32 1.0, %v417
    %v419 = vtanh.pop %v412
    %v420 = vmul.f32 %v418, %v328
    %422 = vrot.lane.b32.xlu0 %v419, 32
    %v423 = vpop.permute.xlu0 %422
    %v425 = vmul.f32 %v418, %v423
    %427 = vrot.lane.b32.xlu0 %v425, 32
    %v428 = vpop.permute.xlu0 %427
    %v430 = vadd.f32 %v420, %v428
    %v431 = vtanh.pop %v430
    %433 = vrot.lane.b32.xlu0 %v431, 32
    %v434 = vpop.permute.xlu0 %433
    %v436 = vmul.f32 %v418, %v434
    %s437 = scalar_lea.vmem %s0, 8
    %v438 = vld [vmem:[%s437] sm:$0x3]
    %440 = vrot.lane.b32.xlu0 %v436, 64
    %v441 = vpop.permute.xlu0 %440
    %v442 = vsel %vm32, %v441, 0
    %444 = vmatprep.subr.mxu0 0.0
    %445 = vmatpush1.msra.mxu0 0.0
    %446 = vmatprep.subr.mxu0 0.0
    %447 = vmatpush1.msra.mxu0 0.0
    %448 = vmatprep.subr.mxu0 0.0
    %449 = vmatpush1.msra.mxu0 0.0
    %450 = vmatprep.subr.mxu0 0.0
    %451 = vmatpush1.msra.mxu0 0.0
    %452 = vmatprep.subr.mxu0 0.0
    %453 = vmatpush1.msra.mxu0 0.0
    %454 = vmatprep.subr.mxu0 0.0
    %455 = vmatpush1.msra.mxu0 0.0
    %456 = vmatprep.subr.mxu0 0.0
    %457 = vmatpush1.msra.mxu0 0.0
    %458 = vmatprep.subr.mxu0 0.0
    %459 = vmatpush1.msra.mxu0 0.0
    %460 = vmatprep.subr.mxu0 0.0
    %461 = vmatpush1.msra.mxu0 0.0
    %462 = vmatprep.subr.mxu0 0.0
    %463 = vmatpush1.msra.mxu0 0.0
    %464 = vmatprep.subr.mxu0 0.0
    %465 = vmatpush1.msra.mxu0 0.0
    %466 = vmatprep.subr.mxu0 0.0
    %467 = vmatpush1.msra.mxu0 0.0
    %468 = vmatprep.subr.mxu0 0.0
    %469 = vmatpush1.msra.mxu0 %v30
    %470 = vmatprep.subr.mxu0 0.0
    %471 = vmatpush1.msra.mxu0 %v29
    %472 = vmatprep.subr.mxu0 0.0
    %473 = vmatpush1.msra.mxu0 %v28
    %474 = vmatprep.subr.mxu0 0.0
    %475 = vmatpush1.msra.mxu0 %v27
    %476 = vmatprep.subr.mxu0 0.0
    %477 = vmatpush2.msra.mxu0 0.0
    %478 = vmatprep.subr.mxu0 0.0
    %479 = vmatpush2.msra.mxu0 0.0
    %480 = vmatprep.subr.mxu0 0.0
    %481 = vmatpush2.msra.mxu0 0.0
    %482 = vmatprep.subr.mxu0 0.0
    %483 = vmatpush2.msra.mxu0 0.0
    %484 = vmatprep.subr.mxu0 0.0
    %485 = vmatpush2.msra.mxu0 0.0
    %486 = vmatprep.subr.mxu0 0.0
    %487 = vmatpush2.msra.mxu0 0.0
    %488 = vmatprep.subr.mxu0 0.0
    %489 = vmatpush2.msra.mxu0 0.0
    %490 = vmatprep.subr.mxu0 0.0
    %491 = vmatpush2.msra.mxu0 0.0
    %492 = vmatprep.subr.mxu0 0.0
    %493 = vmatpush2.msra.mxu0 0.0
    %494 = vmatprep.subr.mxu0 0.0
    %495 = vmatpush2.msra.mxu0 0.0
    %496 = vmatprep.subr.mxu0 0.0
    %497 = vmatpush2.msra.mxu0 0.0
    %498 = vmatprep.subr.mxu0 0.0
    %499 = vmatpush2.msra.mxu0 0.0
    %500 = vmatprep.subr.mxu0 0.0
    %501 = vmatpush2.msra.mxu0 0.0
    %502 = vmatprep.subr.mxu0 0.0
    %503 = vmatpush2.msra.mxu0 0.0
    %504 = vmatprep.subr.mxu0 0.0
    %505 = vmatpush2.msra.mxu0 0.0
    %506 = vmatprep.subr.mxu0 0.0
    %507 = vmatpush2.msra.mxu0 0.0
    %508 = vmatprep.mubr.f32.mxu0 0.0
    %509 = vmatmul.mubr.f32.gmra.mxu0 %v442
    %v510 = vpop.f32.mrf.mxu0
    %v511 = vadd.f32 0.0, %v510
    %v512 = vpop.f32.mrf.mxu0
    %513 = vdwg.mxu0
    %v514 = vadd.f32 %v438, %v511
    %v515 = vxor.u32 %v514, 2147483648
    %v516 = vmul.f32 %v515, 1.442695
    %v517 = vpow.pop %v516
    %v518 = vadd.f32 %v517, 1.0
    %v519 = vrcp.pop %v518
    %v520 = vmul.f32 1.0, %v519
    %v521 = vtanh.pop %v514
    %v522 = vmul.f32 %v520, %v430
    %524 = vrot.lane.b32.xlu0 %v521, 32
    %v525 = vpop.permute.xlu0 %524
    %v527 = vmul.f32 %v520, %v525
    %529 = vrot.lane.b32.xlu0 %v527, 32
    %v530 = vpop.permute.xlu0 %529
    %v532 = vadd.f32 %v522, %v530
    %v533 = vtanh.pop %v532
    %535 = vrot.lane.b32.xlu0 %v533, 32
    %v536 = vpop.permute.xlu0 %535
    %v538 = vmul.f32 %v520, %v536
    %s539 = scalar_lea.vmem %s0, 10
    %v540 = vld [vmem:[%s539] sm:$0x3]
    %542 = vrot.lane.b32.xlu0 %v538, 64
    %v543 = vpop.permute.xlu0 %542
    %v544 = vsel %vm32, %v543, 0
    %546 = vmatprep.subr.mxu0 0.0
    %547 = vmatpush1.msra.mxu0 0.0
    %548 = vmatprep.subr.mxu0 0.0
    %549 = vmatpush1.msra.mxu0 0.0
    %550 = vmatprep.subr.mxu0 0.0
    %551 = vmatpush1.msra.mxu0 0.0
    %552 = vmatprep.subr.mxu0 0.0
    %553 = vmatpush1.msra.mxu0 0.0
    %554 = vmatprep.subr.mxu0 0.0
    %555 = vmatpush1.msra.mxu0 0.0
    %556 = vmatprep.subr.mxu0 0.0
    %557 = vmatpush1.msra.mxu0 0.0
    %558 = vmatprep.subr.mxu0 0.0
    %559 = vmatpush1.msra.mxu0 0.0
    %560 = vmatprep.subr.mxu0 0.0
    %561 = vmatpush1.msra.mxu0 0.0
    %562 = vmatprep.subr.mxu0 0.0
    %563 = vmatpush1.msra.mxu0 0.0
    %564 = vmatprep.subr.mxu0 0.0
    %565 = vmatpush1.msra.mxu0 0.0
    %566 = vmatprep.subr.mxu0 0.0
    %567 = vmatpush1.msra.mxu0 0.0
    %568 = vmatprep.subr.mxu0 0.0
    %569 = vmatpush1.msra.mxu0 0.0
    %570 = vmatprep.subr.mxu0 0.0
    %571 = vmatpush1.msra.mxu0 %v30
    %572 = vmatprep.subr.mxu0 0.0
    %573 = vmatpush1.msra.mxu0 %v29
    %574 = vmatprep.subr.mxu0 0.0
    %575 = vmatpush1.msra.mxu0 %v28
    %576 = vmatprep.subr.mxu0 0.0
    %577 = vmatpush1.msra.mxu0 %v27
    %578 = vmatprep.subr.mxu0 0.0
    %579 = vmatpush2.msra.mxu0 0.0
    %580 = vmatprep.subr.mxu0 0.0
    %581 = vmatpush2.msra.mxu0 0.0
    %582 = vmatprep.subr.mxu0 0.0
    %583 = vmatpush2.msra.mxu0 0.0
    %584 = vmatprep.subr.mxu0 0.0
    %585 = vmatpush2.msra.mxu0 0.0
    %586 = vmatprep.subr.mxu0 0.0
    %587 = vmatpush2.msra.mxu0 0.0
    %588 = vmatprep.subr.mxu0 0.0
    %589 = vmatpush2.msra.mxu0 0.0
    %590 = vmatprep.subr.mxu0 0.0
    %591 = vmatpush2.msra.mxu0 0.0
    %592 = vmatprep.subr.mxu0 0.0
    %593 = vmatpush2.msra.mxu0 0.0
    %594 = vmatprep.subr.mxu0 0.0
    %595 = vmatpush2.msra.mxu0 0.0
    %596 = vmatprep.subr.mxu0 0.0
    %597 = vmatpush2.msra.mxu0 0.0
    %598 = vmatprep.subr.mxu0 0.0
    %599 = vmatpush2.msra.mxu0 0.0
    %600 = vmatprep.subr.mxu0 0.0
    %601 = vmatpush2.msra.mxu0 0.0
    %602 = vmatprep.subr.mxu0 0.0
    %603 = vmatpush2.msra.mxu0 0.0
    %604 = vmatprep.subr.mxu0 0.0
    %605 = vmatpush2.msra.mxu0 0.0
    %606 = vmatprep.subr.mxu0 0.0
    %607 = vmatpush2.msra.mxu0 0.0
    %608 = vmatprep.subr.mxu0 0.0
    %609 = vmatpush2.msra.mxu0 0.0
    %610 = vmatprep.mubr.f32.mxu0 0.0
    %611 = vmatmul.mubr.f32.gmra.mxu0 %v544
    %v612 = vpop.f32.mrf.mxu0
    %v613 = vadd.f32 0.0, %v612
    %v614 = vpop.f32.mrf.mxu0
    %615 = vdwg.mxu0
    %v616 = vadd.f32 %v540, %v613
    %v617 = vxor.u32 %v616, 2147483648
    %v618 = vmul.f32 %v617, 1.442695
    %v619 = vpow.pop %v618
    %v620 = vadd.f32 %v619, 1.0
    %v621 = vrcp.pop %v620
    %v622 = vmul.f32 1.0, %v621
    %v623 = vtanh.pop %v616
    %v624 = vmul.f32 %v622, %v532
    %626 = vrot.lane.b32.xlu0 %v623, 32
    %v627 = vpop.permute.xlu0 %626
    %v629 = vmul.f32 %v622, %v627
    %631 = vrot.lane.b32.xlu0 %v629, 32
    %v632 = vpop.permute.xlu0 %631
    %v634 = vadd.f32 %v624, %v632
    %v635 = vtanh.pop %v634
    %637 = vrot.lane.b32.xlu0 %v635, 32
    %v638 = vpop.permute.xlu0 %637
    %v640 = vmul.f32 %v622, %v638
    %s641 = scalar_lea.vmem %s0, 12
    %v642 = vld [vmem:[%s641] sm:$0x3]
    %644 = vrot.lane.b32.xlu0 %v640, 64
    %v645 = vpop.permute.xlu0 %644
    %v646 = vsel %vm32, %v645, 0
    %648 = vmatprep.subr.mxu0 0.0
    %649 = vmatpush1.msra.mxu0 0.0
    %650 = vmatprep.subr.mxu0 0.0
    %651 = vmatpush1.msra.mxu0 0.0
    %652 = vmatprep.subr.mxu0 0.0
    %653 = vmatpush1.msra.mxu0 0.0
    %654 = vmatprep.subr.mxu0 0.0
    %655 = vmatpush1.msra.mxu0 0.0
    %656 = vmatprep.subr.mxu0 0.0
    %657 = vmatpush1.msra.mxu0 0.0
    %658 = vmatprep.subr.mxu0 0.0
    %659 = vmatpush1.msra.mxu0 0.0
    %660 = vmatprep.subr.mxu0 0.0
    %661 = vmatpush1.msra.mxu0 0.0
    %662 = vmatprep.subr.mxu0 0.0
    %663 = vmatpush1.msra.mxu0 0.0
    %664 = vmatprep.subr.mxu0 0.0
    %665 = vmatpush1.msra.mxu0 0.0
    %666 = vmatprep.subr.mxu0 0.0
    %667 = vmatpush1.msra.mxu0 0.0
    %668 = vmatprep.subr.mxu0 0.0
    %669 = vmatpush1.msra.mxu0 0.0
    %670 = vmatprep.subr.mxu0 0.0
    %671 = vmatpush1.msra.mxu0 0.0
    %672 = vmatprep.subr.mxu0 0.0
    %673 = vmatpush1.msra.mxu0 %v30
    %674 = vmatprep.subr.mxu0 0.0
    %675 = vmatpush1.msra.mxu0 %v29
    %676 = vmatprep.subr.mxu0 0.0
    %677 = vmatpush1.msra.mxu0 %v28
    %678 = vmatprep.subr.mxu0 0.0
    %679 = vmatpush1.msra.mxu0 %v27
    %680 = vmatprep.subr.mxu0 0.0
    %681 = vmatpush2.msra.mxu0 0.0
    %682 = vmatprep.subr.mxu0 0.0
    %683 = vmatpush2.msra.mxu0 0.0
    %684 = vmatprep.subr.mxu0 0.0
    %685 = vmatpush2.msra.mxu0 0.0
    %686 = vmatprep.subr.mxu0 0.0
    %687 = vmatpush2.msra.mxu0 0.0
    %688 = vmatprep.subr.mxu0 0.0
    %689 = vmatpush2.msra.mxu0 0.0
    %690 = vmatprep.subr.mxu0 0.0
    %691 = vmatpush2.msra.mxu0 0.0
    %692 = vmatprep.subr.mxu0 0.0
    %693 = vmatpush2.msra.mxu0 0.0
    %694 = vmatprep.subr.mxu0 0.0
    %695 = vmatpush2.msra.mxu0 0.0
    %696 = vmatprep.subr.mxu0 0.0
    %697 = vmatpush2.msra.mxu0 0.0
    %698 = vmatprep.subr.mxu0 0.0
    %699 = vmatpush2.msra.mxu0 0.0
    %700 = vmatprep.subr.mxu0 0.0
    %701 = vmatpush2.msra.mxu0 0.0
    %702 = vmatprep.subr.mxu0 0.0
    %703 = vmatpush2.msra.mxu0 0.0
    %704 = vmatprep.subr.mxu0 0.0
    %705 = vmatpush2.msra.mxu0 0.0
    %706 = vmatprep.subr.mxu0 0.0
    %707 = vmatpush2.msra.mxu0 0.0
    %708 = vmatprep.subr.mxu0 0.0
    %709 = vmatpush2.msra.mxu0 0.0
    %710 = vmatprep.subr.mxu0 0.0
    %711 = vmatpush2.msra.mxu0 0.0
    %712 = vmatprep.mubr.f32.mxu0 0.0
    %713 = vmatmul.mubr.f32.gmra.mxu0 %v646
    %v714 = vpop.f32.mrf.mxu0
    %v715 = vadd.f32 0.0, %v714
    %v716 = vpop.f32.mrf.mxu0
    %717 = vdwg.mxu0
    %v718 = vadd.f32 %v642, %v715
    %v719 = vxor.u32 %v718, 2147483648
    %v720 = vmul.f32 %v719, 1.442695
    %v721 = vpow.pop %v720
    %v722 = vadd.f32 %v721, 1.0
    %v723 = vrcp.pop %v722
    %v724 = vmul.f32 1.0, %v723
    %v725 = vtanh.pop %v718
    %v726 = vmul.f32 %v724, %v634
    %728 = vrot.lane.b32.xlu0 %v725, 32
    %v729 = vpop.permute.xlu0 %728
    %v731 = vmul.f32 %v724, %v729
    %733 = vrot.lane.b32.xlu0 %v731, 32
    %v734 = vpop.permute.xlu0 %733
    %v736 = vadd.f32 %v726, %v734
    %v737 = vtanh.pop %v736
    %739 = vrot.lane.b32.xlu0 %v737, 32
    %v740 = vpop.permute.xlu0 %739
    %v742 = vmul.f32 %v724, %v740
    %s743 = scalar_lea.vmem %s0, 14
    %v744 = vld [vmem:[%s743] sm:$0x3]
    %746 = vrot.lane.b32.xlu0 %v742, 64
    %v747 = vpop.permute.xlu0 %746
    %v748 = vsel %vm32, %v747, 0
    %750 = vmatprep.subr.mxu0 0.0
    %751 = vmatpush1.msra.mxu0 0.0
    %752 = vmatprep.subr.mxu0 0.0
    %753 = vmatpush1.msra.mxu0 0.0
    %754 = vmatprep.subr.mxu0 0.0
    %755 = vmatpush1.msra.mxu0 0.0
    %756 = vmatprep.subr.mxu0 0.0
    %757 = vmatpush1.msra.mxu0 0.0
    %758 = vmatprep.subr.mxu0 0.0
    %759 = vmatpush1.msra.mxu0 0.0
    %760 = vmatprep.subr.mxu0 0.0
    %761 = vmatpush1.msra.mxu0 0.0
    %762 = vmatprep.subr.mxu0 0.0
    %763 = vmatpush1.msra.mxu0 0.0
    %764 = vmatprep.subr.mxu0 0.0
    %765 = vmatpush1.msra.mxu0 0.0
    %766 = vmatprep.subr.mxu0 0.0
    %767 = vmatpush1.msra.mxu0 0.0
    %768 = vmatprep.subr.mxu0 0.0
    %769 = vmatpush1.msra.mxu0 0.0
    %770 = vmatprep.subr.mxu0 0.0
    %771 = vmatpush1.msra.mxu0 0.0
    %772 = vmatprep.subr.mxu0 0.0
    %773 = vmatpush1.msra.mxu0 0.0
    %774 = vmatprep.subr.mxu0 0.0
    %775 = vmatpush1.msra.mxu0 %v30
    %776 = vmatprep.subr.mxu0 0.0
    %777 = vmatpush1.msra.mxu0 %v29
    %778 = vmatprep.subr.mxu0 0.0
    %779 = vmatpush1.msra.mxu0 %v28
    %780 = vmatprep.subr.mxu0 0.0
    %781 = vmatpush1.msra.mxu0 %v27
    %782 = vmatprep.subr.mxu0 0.0
    %783 = vmatpush2.msra.mxu0 0.0
    %784 = vmatprep.subr.mxu0 0.0
    %785 = vmatpush2.msra.mxu0 0.0
    %786 = vmatprep.subr.mxu0 0.0
    %787 = vmatpush2.msra.mxu0 0.0
    %788 = vmatprep.subr.mxu0 0.0
    %789 = vmatpush2.msra.mxu0 0.0
    %790 = vmatprep.subr.mxu0 0.0
    %791 = vmatpush2.msra.mxu0 0.0
    %792 = vmatprep.subr.mxu0 0.0
    %793 = vmatpush2.msra.mxu0 0.0
    %794 = vmatprep.subr.mxu0 0.0
    %795 = vmatpush2.msra.mxu0 0.0
    %796 = vmatprep.subr.mxu0 0.0
    %797 = vmatpush2.msra.mxu0 0.0
    %798 = vmatprep.subr.mxu0 0.0
    %799 = vmatpush2.msra.mxu0 0.0
    %800 = vmatprep.subr.mxu0 0.0
    %801 = vmatpush2.msra.mxu0 0.0
    %802 = vmatprep.subr.mxu0 0.0
    %803 = vmatpush2.msra.mxu0 0.0
    %804 = vmatprep.subr.mxu0 0.0
    %805 = vmatpush2.msra.mxu0 0.0
    %806 = vmatprep.subr.mxu0 0.0
    %807 = vmatpush2.msra.mxu0 0.0
    %808 = vmatprep.subr.mxu0 0.0
    %809 = vmatpush2.msra.mxu0 0.0
    %810 = vmatprep.subr.mxu0 0.0
    %811 = vmatpush2.msra.mxu0 0.0
    %812 = vmatprep.subr.mxu0 0.0
    %813 = vmatpush2.msra.mxu0 0.0
    %814 = vmatprep.mubr.f32.mxu0 0.0
    %815 = vmatmul.mubr.f32.gmra.mxu0 %v748
    %v816 = vpop.f32.mrf.mxu0
    %v817 = vadd.f32 0.0, %v816
    %v818 = vpop.f32.mrf.mxu0
    %819 = vdwg.mxu0
    %v820 = vadd.f32 %v744, %v817
    %v821 = vxor.u32 %v820, 2147483648
    %v822 = vmul.f32 %v821, 1.442695
    %v823 = vpow.pop %v822
    %v824 = vadd.f32 %v823, 1.0
    %v825 = vrcp.pop %v824
    %v826 = vmul.f32 1.0, %v825
    %v827 = vtanh.pop %v820
    %v828 = vmul.f32 %v826, %v736
    %830 = vrot.lane.b32.xlu0 %v827, 32
    %v831 = vpop.permute.xlu0 %830
    %v833 = vmul.f32 %v826, %v831
    %835 = vrot.lane.b32.xlu0 %v833, 32
    %v836 = vpop.permute.xlu0 %835
    %v838 = vadd.f32 %v828, %v836
    %v839 = vtanh.pop %v838
    %841 = vrot.lane.b32.xlu0 %v839, 32
    %v842 = vpop.permute.xlu0 %841
    %v844 = vmul.f32 %v826, %v842
    %v845 = vld [vmem:[%s2] sm:$0xff]
    %v846 = vld [vmem:[%s2 + $0x8] sm:$0xff]
    %v847 = vld [vmem:[%s2 + $0x10] sm:$0xff]
    %v848 = vld [vmem:[%s2 + $0x18] sm:$0xff]
    %v849 = vld [vmem:[%s2 + $0x20] sm:$0xff]
    %v850 = vld [vmem:[%s2 + $0x28] sm:$0xff]
    %v851 = vld [vmem:[%s2 + $0x30] sm:$0xff]
    %v852 = vld [vmem:[%s2 + $0x38] sm:$0xff]
    %v853 = vld [vmem:[%s3] sm:$0x3]
    %v855 = vlaneseq
    %v856 = vshrl.u32 %v855, 7
    %v857 = vsub.s32 0, %v856
    %v858 = vrot.slane %v853, %v857
    %v859 = vlaneseq
    %v860 = vshrl.u32 %v859, 7
    %v861 = vsub.s32 1, %v860
    %v862 = vrot.slane %v853, %v861
    %866 = vrot.lane.b32.xlu0 %v844, 64
    %v867 = vpop.permute.xlu0 %866
    %v868 = vsel %vm32, %v867, 0
    %870 = vmatprep.subr.mxu0 0.0
    %871 = vmatpush1.msra.mxu0 0.0
    %872 = vmatprep.subr.mxu0 0.0
    %873 = vmatpush1.msra.mxu0 0.0
    %874 = vmatprep.subr.mxu0 0.0
    %875 = vmatpush1.msra.mxu0 0.0
    %876 = vmatprep.subr.mxu0 0.0
    %877 = vmatpush1.msra.mxu0 0.0
    %878 = vmatprep.subr.mxu0 0.0
    %879 = vmatpush1.msra.mxu0 0.0
    %880 = vmatprep.subr.mxu0 0.0
    %881 = vmatpush1.msra.mxu0 0.0
    %882 = vmatprep.subr.mxu0 0.0
    %883 = vmatpush1.msra.mxu0 0.0
    %884 = vmatprep.subr.mxu0 0.0
    %885 = vmatpush1.msra.mxu0 0.0
    %886 = vmatprep.subr.mxu0 0.0
    %887 = vmatpush1.msra.mxu0 0.0
    %888 = vmatprep.subr.mxu0 0.0
    %889 = vmatpush1.msra.mxu0 0.0
    %890 = vmatprep.subr.mxu0 0.0
    %891 = vmatpush1.msra.mxu0 0.0
    %892 = vmatprep.subr.mxu0 0.0
    %893 = vmatpush1.msra.mxu0 0.0
    %894 = vmatprep.subr.mxu0 %v852
    %895 = vmatpush1.msra.mxu0 %v851
    %896 = vmatprep.subr.mxu0 %v850
    %897 = vmatpush1.msra.mxu0 %v849
    %898 = vmatprep.subr.mxu0 %v848
    %899 = vmatpush1.msra.mxu0 %v847
    %900 = vmatprep.subr.mxu0 %v846
    %901 = vmatpush1.msra.mxu0 %v845
    %902 = vmatprep.subr.mxu0 0.0
    %903 = vmatpush2.msra.mxu0 0.0
    %904 = vmatprep.subr.mxu0 0.0
    %905 = vmatpush2.msra.mxu0 0.0
    %906 = vmatprep.subr.mxu0 0.0
    %907 = vmatpush2.msra.mxu0 0.0
    %908 = vmatprep.subr.mxu0 0.0
    %909 = vmatpush2.msra.mxu0 0.0
    %910 = vmatprep.subr.mxu0 0.0
    %911 = vmatpush2.msra.mxu0 0.0
    %912 = vmatprep.subr.mxu0 0.0
    %913 = vmatpush2.msra.mxu0 0.0
    %914 = vmatprep.subr.mxu0 0.0
    %915 = vmatpush2.msra.mxu0 0.0
    %916 = vmatprep.subr.mxu0 0.0
    %917 = vmatpush2.msra.mxu0 0.0
    %918 = vmatprep.subr.mxu0 0.0
    %919 = vmatpush2.msra.mxu0 0.0
    %920 = vmatprep.subr.mxu0 0.0
    %921 = vmatpush2.msra.mxu0 0.0
    %922 = vmatprep.subr.mxu0 0.0
    %923 = vmatpush2.msra.mxu0 0.0
    %924 = vmatprep.subr.mxu0 0.0
    %925 = vmatpush2.msra.mxu0 0.0
    %926 = vmatprep.subr.mxu0 0.0
    %927 = vmatpush2.msra.mxu0 0.0
    %928 = vmatprep.subr.mxu0 0.0
    %929 = vmatpush2.msra.mxu0 0.0
    %930 = vmatprep.subr.mxu0 0.0
    %931 = vmatpush2.msra.mxu0 0.0
    %932 = vmatprep.subr.mxu0 0.0
    %933 = vmatpush2.msra.mxu0 0.0
    %934 = vmatprep.mubr.f32.mxu0 0.0
    %935 = vmatmul.mubr.f32.gmra.mxu0 %v868
    %v936 = vpop.f32.mrf.mxu0
    %v937 = vadd.f32 %v858, %v936
    %v938 = vpop.f32.mrf.mxu0
    %v939 = vadd.f32 %v862, %v938
    %940 = vdwg.mxu0
    %v941 = vmax.f32 %v937, 0.0
    %v942 = vmax.f32 %v939, 0.0
    %v943 = vld [vmem:[%s4] sm:$0xf]
    %v946 = vunpack.c.l.s4 1983009808
    %v947 = vunpack.c.0.s8 %v946
    %v948 = vlaneseq
    %v949 = vshrl.u32 %v948, 7
    %v950 = vsub.s32 %v947, %v949
    %v951 = vrot.slane %v943, %v950
    %v952 = vcombine.high %v951, %v951
    %v955 = vmul.f32 %v941, %v951
    %v956 = vmul.f32 %v942, %v952
    %v957 = vld [vmem:[%s5] sm:$0xff]
    %v958 = vld [vmem:[%s5 + $0x8] sm:$0xff]
    %v959 = vld [vmem:[%s5 + $0x10] sm:$0xff]
    %v960 = vld [vmem:[%s5 + $0x18] sm:$0xff]
    %v961 = vld [vmem:[%s5 + $0x20] sm:$0xff]
    %v962 = vld [vmem:[%s5 + $0x28] sm:$0xff]
    %v963 = vld [vmem:[%s5 + $0x30] sm:$0xff]
    %v964 = vld [vmem:[%s5 + $0x38] sm:$0xff]
    %v965 = vld [vmem:[%s5 + $0x40] sm:$0xff]
    %v966 = vld [vmem:[%s5 + $0x48] sm:$0xff]
    %v967 = vld [vmem:[%s5 + $0x50] sm:$0xff]
    %v968 = vld [vmem:[%s5 + $0x58] sm:$0xff]
    %v969 = vld [vmem:[%s5 + $0x60] sm:$0xff]
    %v970 = vld [vmem:[%s5 + $0x68] sm:$0xff]
    %v971 = vld [vmem:[%s5 + $0x70] sm:$0xff]
    %v972 = vld [vmem:[%s5 + $0x78] sm:$0xff]
    %v973 = vld [vmem:[%s5 + $0x80] sm:$0xff]
    %v974 = vld [vmem:[%s5 + $0x88] sm:$0xff]
    %v975 = vld [vmem:[%s5 + $0x90] sm:$0xff]
    %v976 = vld [vmem:[%s5 + $0x98] sm:$0xff]
    %v977 = vld [vmem:[%s5 + $0xa0] sm:$0xff]
    %v978 = vld [vmem:[%s5 + $0xa8] sm:$0xff]
    %v979 = vld [vmem:[%s5 + $0xb0] sm:$0xff]
    %v980 = vld [vmem:[%s5 + $0xb8] sm:$0xff]
    %v981 = vld [vmem:[%s5 + $0xc0] sm:$0xff]
    %v982 = vld [vmem:[%s5 + $0xc8] sm:$0xff]
    %v983 = vld [vmem:[%s5 + $0xd0] sm:$0xff]
    %v984 = vld [vmem:[%s5 + $0xd8] sm:$0xff]
    %v985 = vld [vmem:[%s5 + $0xe0] sm:$0xff]
    %v986 = vld [vmem:[%s5 + $0xe8] sm:$0xff]
    %v987 = vld [vmem:[%s5 + $0xf0] sm:$0xff]
    %v988 = vld [vmem:[%s5 + $0xf8] sm:$0xff]
    %v989 = vld [vmem:[%s6] sm:$0x1]
    %v991 = vlaneseq
    %v992 = vshrl.u32 %v991, 7
    %v993 = vsub.s32 0, %v992
    %v994 = vrot.slane %v989, %v993
    %996 = vmatprep.subr.mxu0 0.0
    %997 = vmatpush1.msra.mxu0 %v972
    %998 = vmatprep.subr.mxu0 0.0
    %999 = vmatpush1.msra.mxu0 %v971
    %1000 = vmatprep.subr.mxu0 0.0
    %1001 = vmatpush1.msra.mxu0 %v970
    %1002 = vmatprep.subr.mxu0 0.0
    %1003 = vmatpush1.msra.mxu0 %v969
    %1004 = vmatprep.subr.mxu0 0.0
    %1005 = vmatpush1.msra.mxu0 %v968
    %1006 = vmatprep.subr.mxu0 0.0
    %1007 = vmatpush1.msra.mxu0 %v967
    %1008 = vmatprep.subr.mxu0 0.0
    %1009 = vmatpush1.msra.mxu0 %v966
    %1010 = vmatprep.subr.mxu0 0.0
    %1011 = vmatpush1.msra.mxu0 %v965
    %1012 = vmatprep.subr.mxu0 0.0
    %1013 = vmatpush1.msra.mxu0 %v964
    %1014 = vmatprep.subr.mxu0 0.0
    %1015 = vmatpush1.msra.mxu0 %v963
    %1016 = vmatprep.subr.mxu0 0.0
    %1017 = vmatpush1.msra.mxu0 %v962
    %1018 = vmatprep.subr.mxu0 0.0
    %1019 = vmatpush1.msra.mxu0 %v961
    %1020 = vmatprep.subr.mxu0 0.0
    %1021 = vmatpush1.msra.mxu0 %v960
    %1022 = vmatprep.subr.mxu0 0.0
    %1023 = vmatpush1.msra.mxu0 %v959
    %1024 = vmatprep.subr.mxu0 0.0
    %1025 = vmatpush1.msra.mxu0 %v958
    %1026 = vmatprep.subr.mxu0 0.0
    %1027 = vmatpush1.msra.mxu0 %v957
    %1028 = vmatprep.subr.mxu0 0.0
    %1029 = vmatpush2.msra.mxu0 %v988
    %1030 = vmatprep.subr.mxu0 0.0
    %1031 = vmatpush2.msra.mxu0 %v987
    %1032 = vmatprep.subr.mxu0 0.0
    %1033 = vmatpush2.msra.mxu0 %v986
    %1034 = vmatprep.subr.mxu0 0.0
    %1035 = vmatpush2.msra.mxu0 %v985
    %1036 = vmatprep.subr.mxu0 0.0
    %1037 = vmatpush2.msra.mxu0 %v984
    %1038 = vmatprep.subr.mxu0 0.0
    %1039 = vmatpush2.msra.mxu0 %v983
    %1040 = vmatprep.subr.mxu0 0.0
    %1041 = vmatpush2.msra.mxu0 %v982
    %1042 = vmatprep.subr.mxu0 0.0
    %1043 = vmatpush2.msra.mxu0 %v981
    %1044 = vmatprep.subr.mxu0 0.0
    %1045 = vmatpush2.msra.mxu0 %v980
    %1046 = vmatprep.subr.mxu0 0.0
    %1047 = vmatpush2.msra.mxu0 %v979
    %1048 = vmatprep.subr.mxu0 0.0
    %1049 = vmatpush2.msra.mxu0 %v978
    %1050 = vmatprep.subr.mxu0 0.0
    %1051 = vmatpush2.msra.mxu0 %v977
    %1052 = vmatprep.subr.mxu0 0.0
    %1053 = vmatpush2.msra.mxu0 %v976
    %1054 = vmatprep.subr.mxu0 0.0
    %1055 = vmatpush2.msra.mxu0 %v975
    %1056 = vmatprep.subr.mxu0 0.0
    %1057 = vmatpush2.msra.mxu0 %v974
    %1058 = vmatprep.subr.mxu0 0.0
    %1059 = vmatpush2.msra.mxu0 %v973
    %1060 = vmatprep.mubr.f32.mxu0 %v956
    %1061 = vmatmul.mubr.f32.gmra.mxu0 %v955
    %v1062 = vpop.f32.mrf.mxu0
    %v1063 = vadd.f32 %v994, %v1062
    %v1064 = vpop.f32.mrf.mxu0
    %1065 = vdwg.mxu0
    %v1066 = vxor.u32 %v1063, 2147483648
    %v1067 = vmul.f32 %v1066, 1.442695
    %v1068 = vpow.pop %v1067
    %v1069 = vadd.f32 %v1068, 1.0
    %v1070 = vrcp.pop %v1069
    %v1071 = vmul.f32 1.0, %v1070
    %vm1072 = vcmask 25600
    %1073 = vst.msk [vmem:[#allocation2] sm:$0x3] %vm1072, %v1071
    // Predicated region
    $region30: #{lstm_v2_forward.1} parent=1 // pred_check
      _
    $region31: #{lstm_v2_forward.1} parent=1 // pred_check_branch
      %1075 = sbr.rel (0) target = $region33
    $region32: #{lstm_v2_forward.1} parent=1 // pred_region
      %s1077 = ssub.s32 32, 32
      %1078 = vsyncadd [#allocation3], %s1077
      %s1080 = sshll.u32 [#allocation2], 4
      %s1081 = int_to_ptr.vmem [resolvable:$true] %s1080
      %1083 = dma.vmem_to_hbm [thread:$0]  %s1081, 32, %s7, [#allocation3]
    $region33: #{lstm_v2_forward.1} parent=1 // pred_fallthru
      _
    // Predicated region
    $region34: #{lstm_v2_forward.1} parent=1 // pred_check
      _
    $region35: #{lstm_v2_forward.1} parent=1 // pred_check_branch
      %1085 = sbr.rel (0) target = $region37
    $region36: #{lstm_v2_forward.1} parent=1 // pred_region
      %1086 = dma.done [#allocation3], 32
    $region37: #{lstm_v2_forward.1} parent=1 // pred_fallthru
      _
    %1087 = vsyncpa [#allocation3], 1

</llo_original>
